<compile_context>
chip_gen: v6e
topology: v6e:2x2x1
jax: 0.10.0
libtpu: 0.0.40
codegen_flags: <defaults>
</compile_context>

<pallas_src>
import jax
import jax.numpy as jnp
from jax.experimental import pallas as pl
from jax.experimental.pallas import tpu as pltpu

F_IN = 3       # real input features
F_PAD = 8      # input feature dim padded to a full sublane group
H1 = 128       # fc1 width
H2 = 64        # fc2 width
TM_MAX = 8192  # max batch-tile (lanes); ~10 MiB live VMEM at this size


def _round_up(n, m):
    return ((n + m - 1) // m) * m


def mlp_kernel(x_ref, w1_ref, b1_ref, w2_ref, b2_ref, w3_ref, b3_ref, o_ref):
    # x_ref: (8, TM) f32, batch in lanes; rows 3..7 are zero padding.
    x_bf = x_ref[...].astype(jnp.bfloat16)

    # fc1 on the MXU: (128, 8) @ (8, TM), bf16 operands, f32 accumulate.
    h1 = jnp.dot(w1_ref[...], x_bf, preferred_element_type=jnp.float32)
    h1 = jnp.maximum(h1 + b1_ref[...], 0.0)               # (128, TM) f32
    # dropout1: identity in eval mode

    # fc2 on the MXU: (64, 128) @ (128, TM), bf16 operands, f32 accumulate.
    h2 = jnp.dot(w2_ref[...], h1.astype(jnp.bfloat16),
                 preferred_element_type=jnp.float32)
    h2 = jnp.maximum(h2 + b2_ref[...], 0.0)                # (64, TM) f32
    # dropout2: identity in eval mode

    # fc3 (out width 1): weighted sublane reduce (XLU) -> lane-dense (1, TM) row.
    logits = jnp.sum(h2 * w3_ref[...], axis=0, keepdims=True) + b3_ref[0, 0]

    # sigmoid: exp on the EUP, approx reciprocal rides the same EUP slot.
    o_ref[...] = pl.reciprocal(1.0 + jnp.exp(-logits), approx=True)


def enhanced_binary_classifier(x, kparams, *, tm_max=TM_MAX):
    """x: (B, 3) float. kparams: output of prepare_kernel_params()."""
    B = x.shape[0]

    # Pad the batch only to a lane multiple (128), not to a multiple of the tile.
    b_pad = _round_up(B, 128)
    tm = min(tm_max, b_pad)
    # Keep at least 2 grid steps once the batch is big enough (v7x megacore).
    if b_pad > 1024 and pl.cdiv(b_pad, tm) < 2:
        tm = _round_up(pl.cdiv(b_pad, 2), 128)
    grid = pl.cdiv(b_pad, tm)

    # Host-side layout prep: batch-in-lanes (feature-major), features padded 3 -> 8.
    x_t = jnp.zeros((F_PAD, b_pad), jnp.float32)
    x_t = x_t.at[:F_IN, :B].set(x.astype(jnp.float32).T)

    const = lambda i: (0, 0)                   # weights/biases stay VMEM-resident
    out = pl.pallas_call(
        mlp_kernel,
        out_shape=jax.ShapeDtypeStruct((1, b_pad), jnp.float32),
        grid=(grid,),
        in_specs=[
            pl.BlockSpec((F_PAD, tm), lambda i: (0, i)),              # x tile (pipelined)
            pl.BlockSpec((H1, F_PAD), const),                         # w1 (bf16)
            pl.BlockSpec((H1, 1), const),                             # b1
            pl.BlockSpec((H2, H1), const),                            # w2 (bf16)
            pl.BlockSpec((H2, 1), const),                             # b2
            pl.BlockSpec((H2, 1), const),                             # w3 (as a column)
            pl.BlockSpec(memory_space=pltpu.MemorySpace.SMEM),        # b3 scalar
        ],
        out_specs=pl.BlockSpec((1, tm), lambda i: (0, i)),
        compiler_params=pltpu.CompilerParams(
            dimension_semantics=("parallel",),      # batch axis is independent
            vmem_limit_bytes=48 * 1024 * 1024),     # explicit cap; safe on v5e/v6e/v7x
    )(x_t, kparams["w1"], kparams["b1"], kparams["w2"], kparams["b2"],
      kparams["w3"], kparams["b3"])
    return out[0, :B].reshape(B, 1)


def init_params(key):
    """PyTorch nn.Linear layout/init: W (out,in), b (out,), U(-1/sqrt(fan_in), +)."""
    ks = jax.random.split(key, 6)

    def lin(kw, kb, fan_in, fan_out):
        bound = 1.0 / (float(fan_in) ** 0.5)
        w = jax.random.uniform(kw, (fan_out, fan_in), jnp.float32, -bound, bound)
        b = jax.random.uniform(kb, (fan_out,), jnp.float32, -bound, bound)
        return w, b

    w1, b1 = lin(ks[0], ks[1], 3, 128)
    w2, b2 = lin(ks[2], ks[3], 128, 64)
    w3, b3 = lin(ks[4], ks[5], 64, 1)
    return {"w1": w1, "b1": b1, "w2": w2, "b2": b2, "w3": w3, "b3": b3}


def prepare_kernel_params(p):
    """Keep PyTorch (out,in) weight layout (matches the transposed activations),
    pad fc1's in-dim 3 -> 8, cast MXU operands to bf16, biases as columns."""
    w1 = jnp.zeros((H1, F_PAD), jnp.float32).at[:, :F_IN].set(p["w1"])
    w1 = w1.astype(jnp.bfloat16)                               # (128, 8)
    b1 = p["b1"].reshape(H1, 1).astype(jnp.float32)
    w2 = p["w2"].astype(jnp.bfloat16)                          # (64, 128)
    b2 = p["b2"].reshape(H2, 1).astype(jnp.float32)
    w3 = p["w3"].reshape(H2, 1).astype(jnp.float32)            # (1,64) -> (64,1)
    b3 = p["b3"].reshape(1, 1).astype(jnp.float32)
    return {"w1": w1, "b1": b1, "w2": w2, "b2": b2, "w3": w3, "b3": b3}


def reference_forward(x, p):
    """Pure-JAX reference matching the kernel's math (bf16 matmuls, f32 accumulate)."""
    h1 = jnp.dot(x.astype(jnp.bfloat16), p["w1"].T.astype(jnp.bfloat16),
                 preferred_element_type=jnp.float32) + p["b1"]
    h1 = jnp.maximum(h1, 0.0)
    h2 = jnp.dot(h1.astype(jnp.bfloat16), p["w2"].T.astype(jnp.bfloat16),
                 preferred_element_type=jnp.float32) + p["b2"]
    h2 = jnp.maximum(h2, 0.0)
    return jax.nn.sigmoid(h2 @ p["w3"].T + p["b3"])


if __name__ == "__main__":
    key = jax.random.PRNGKey(0)
    k_param, k_x = jax.random.split(key)

    params = init_params(k_param)
    kparams = prepare_kernel_params(params)

    B = 8
    x = jax.random.normal(k_x, (B, F_IN), dtype=jnp.float32)

    out = enhanced_binary_classifier(x, kparams)
    out = jax.block_until_ready(out)

    ref = reference_forward(x, params)
    assert out.shape == (B, 1)
    # approx reciprocal in the sigmoid + bf16 rounding-order differences -> ~1e-3 abs
    assert jnp.allclose(out, ref, atol=5e-3, rtol=5e-3), (out, ref)

    print("KERNEL_OK")
</pallas_src>

<mosaic_0001>
module attributes {stable_mosaic.version = 11 : i64} {
  func.func @mlp_kernel(%arg0: i32, %arg1: memref<8x128xf32, #tpu.memory_space<vmem>>, %arg2: memref<128x8xbf16, #tpu.memory_space<vmem>>, %arg3: memref<128x1xf32, #tpu.memory_space<vmem>>, %arg4: memref<64x128xbf16, #tpu.memory_space<vmem>>, %arg5: memref<64x1xf32, #tpu.memory_space<vmem>>, %arg6: memref<64x1xf32, #tpu.memory_space<vmem>>, %arg7: memref<1x1xf32, #tpu.memory_space<smem>>, %arg8: memref<1x128xf32, #tpu.memory_space<vmem>>) attributes {dimension_semantics = [#tpu.dimension_semantics<parallel>], iteration_bounds = array<i64: 1>, scalar_prefetch = 0 : i64, scratch_operands = 0 : i64, tpu.core_type = #tpu.core_type<tc>, window_params = [{transform_indices = @transform_0, window_bounds = array<i64: 8, 128>}, {pipeline_mode = #tpu.pipeline_mode<synchronous>, transform_indices = @transform_1, window_bounds = array<i64: 128, 8>}, {pipeline_mode = #tpu.pipeline_mode<synchronous>, transform_indices = @transform_2, window_bounds = array<i64: 128, 1>}, {pipeline_mode = #tpu.pipeline_mode<synchronous>, transform_indices = @transform_3, window_bounds = array<i64: 64, 128>}, {pipeline_mode = #tpu.pipeline_mode<synchronous>, transform_indices = @transform_4, window_bounds = array<i64: 64, 1>}, {pipeline_mode = #tpu.pipeline_mode<synchronous>, transform_indices = @transform_5, window_bounds = array<i64: 64, 1>}, {transform_indices = @transform_6, window_bounds = array<i64: 1, 1>}, {transform_indices = @transform_7, window_bounds = array<i64: 1, 128>}]} {
    %c0 = arith.constant 0 : index
    %c0_0 = arith.constant 0 : index
    %0 = vector.load %arg1[%c0, %c0_0] : memref<8x128xf32, #tpu.memory_space<vmem>>, vector<8x128xf32>
    %1 = arith.truncf %0 : vector<8x128xf32> to vector<8x128xbf16>
    %c0_1 = arith.constant 0 : index
    %c0_2 = arith.constant 0 : index
    %2 = vector.load %arg2[%c0_1, %c0_2] : memref<128x8xbf16, #tpu.memory_space<vmem>>, vector<128x8xbf16>
    %cst = arith.constant dense<0.000000e+00> : vector<128x128xf32>
    %3 = tpu.matmul %2, %1, %cst {dimension_numbers = #tpu.dot_dimension_numbers<[1], [0], [0], [1], [0, 0, 1, 1], [], []>} : vector<128x8xbf16>, vector<8x128xbf16>, vector<128x128xf32> -> vector<128x128xf32>
    %c0_3 = arith.constant 0 : index
    %c0_4 = arith.constant 0 : index
    %4 = vector.load %arg3[%c0_3, %c0_4] : memref<128x1xf32, #tpu.memory_space<vmem>>, vector<128x1xf32>
    %5 = vector.broadcast %4 : vector<128x1xf32> to vector<128x128xf32>
    %6 = arith.addf %3, %5 : vector<128x128xf32>
    %cst_5 = arith.constant 0.000000e+00 : f32
    %7 = vector.broadcast %cst_5 : f32 to vector<128x128xf32>
    %8 = arith.maximumf %6, %7 : vector<128x128xf32>
    %c0_6 = arith.constant 0 : index
    %c0_7 = arith.constant 0 : index
    %9 = vector.load %arg4[%c0_6, %c0_7] : memref<64x128xbf16, #tpu.memory_space<vmem>>, vector<64x128xbf16>
    %10 = arith.truncf %8 : vector<128x128xf32> to vector<128x128xbf16>
    %cst_8 = arith.constant dense<0.000000e+00> : vector<64x128xf32>
    %11 = tpu.matmul %9, %10, %cst_8 {dimension_numbers = #tpu.dot_dimension_numbers<[1], [0], [0], [1], [0, 0, 1, 1], [], []>} : vector<64x128xbf16>, vector<128x128xbf16>, vector<64x128xf32> -> vector<64x128xf32>
    %c0_9 = arith.constant 0 : index
    %c0_10 = arith.constant 0 : index
    %12 = vector.load %arg5[%c0_9, %c0_10] : memref<64x1xf32, #tpu.memory_space<vmem>>, vector<64x1xf32>
    %13 = vector.broadcast %12 : vector<64x1xf32> to vector<64x128xf32>
    %14 = arith.addf %11, %13 : vector<64x128xf32>
    %cst_11 = arith.constant 0.000000e+00 : f32
    %15 = vector.broadcast %cst_11 : f32 to vector<64x128xf32>
    %16 = arith.maximumf %14, %15 : vector<64x128xf32>
    %c0_12 = arith.constant 0 : index
    %c0_13 = arith.constant 0 : index
    %17 = vector.load %arg6[%c0_12, %c0_13] : memref<64x1xf32, #tpu.memory_space<vmem>>, vector<64x1xf32>
    %18 = vector.broadcast %17 : vector<64x1xf32> to vector<64x128xf32>
    %19 = arith.mulf %16, %18 : vector<64x128xf32>
    %cst_14 = arith.constant dense<0.000000e+00> : vector<128xf32>
    %20 = vector.multi_reduction <add>, %19, %cst_14 [0] : vector<64x128xf32> to vector<128xf32>
    %21 = vector.shape_cast %20 : vector<128xf32> to vector<1x128xf32>
    %c0_15 = arith.constant 0 : index
    %c0_16 = arith.constant 0 : index
    %22 = memref.load %arg7[%c0_15, %c0_16] : memref<1x1xf32, #tpu.memory_space<smem>>
    %23 = vector.broadcast %22 : f32 to vector<1x128xf32>
    %24 = arith.addf %21, %23 : vector<1x128xf32>
    %cst_17 = arith.constant 0.000000e+00 : f32
    %25 = vector.broadcast %cst_17 : f32 to vector<1x128xf32>
    %26 = arith.subf %25, %24 : vector<1x128xf32>
    %27 = math.exp %26 : vector<1x128xf32>
    %cst_18 = arith.constant 1.000000e+00 : f32
    %28 = vector.broadcast %cst_18 : f32 to vector<1x128xf32>
    %29 = arith.addf %28, %27 : vector<1x128xf32>
    %30 = tpu.reciprocal %29 {approx = true} : vector<1x128xf32> -> vector<1x128xf32>
    %c0_19 = arith.constant 0 : index
    %c0_20 = arith.constant 0 : index
    %31 = vector.load %arg8[%c0_19, %c0_20] : memref<1x128xf32, #tpu.memory_space<vmem>>, vector<1x128xf32>
    tpu.vector_store %arg8[%c0_19, %c0_20], %30 {strides = array<i32>} : memref<1x128xf32, #tpu.memory_space<vmem>>, vector<1x128xf32>,
    return
  }
  func.func @transform_0(%arg0: i32) -> (i32, i32) {
    %c0_i32 = arith.constant 0 : i32
    %c0_i32_0 = arith.constant 0 : i32
    return %c0_i32, %arg0 : i32, i32
  }
  func.func @transform_1(%arg0: i32) -> (i32, i32) {
    %c0_i32 = arith.constant 0 : i32
    %c0_i32_0 = arith.constant 0 : i32
    %c0_i32_1 = arith.constant 0 : i32
    return %c0_i32, %c0_i32_0 : i32, i32
  }
  func.func @transform_2(%arg0: i32) -> (i32, i32) {
    %c0_i32 = arith.constant 0 : i32
    %c0_i32_0 = arith.constant 0 : i32
    %c0_i32_1 = arith.constant 0 : i32
    return %c0_i32, %c0_i32_0 : i32, i32
  }
  func.func @transform_3(%arg0: i32) -> (i32, i32) {
    %c0_i32 = arith.constant 0 : i32
    %c0_i32_0 = arith.constant 0 : i32
    %c0_i32_1 = arith.constant 0 : i32
    return %c0_i32, %c0_i32_0 : i32, i32
  }
  func.func @transform_4(%arg0: i32) -> (i32, i32) {
    %c0_i32 = arith.constant 0 : i32
    %c0_i32_0 = arith.constant 0 : i32
    %c0_i32_1 = arith.constant 0 : i32
    return %c0_i32, %c0_i32_0 : i32, i32
  }
  func.func @transform_5(%arg0: i32) -> (i32, i32) {
    %c0_i32 = arith.constant 0 : i32
    %c0_i32_0 = arith.constant 0 : i32
    %c0_i32_1 = arith.constant 0 : i32
    return %c0_i32, %c0_i32_0 : i32, i32
  }
  func.func @transform_6(%arg0: i32) -> (i32, i32) {
    %c0_i32 = arith.constant 0 : i32
    %c0_i32_0 = arith.constant 0 : i32
    %c0_i32_1 = arith.constant 0 : i32
    return %c0_i32, %c0_i32_0 : i32, i32
  }
  func.func @transform_7(%arg0: i32) -> (i32, i32) {
    %c0_i32 = arith.constant 0 : i32
    %c0_i32_0 = arith.constant 0 : i32
    return %c0_i32, %arg0 : i32, i32
  }
}

</mosaic_0001>

<llo_original>
// kernel: tpu_custom_call.1
$region0: #{tpu_custom_call.1}
  #allocation0 [shape = 'u32[]', space=smem, size = 0x4, offset = 0x4, fixed_abs, tag = 'smem constant byte address 0x4 - core index']
  #allocation1 [shape = 'u32[144,128]{1,0:T(1,128)}', space=vmem, size = 0x12000, scoped, tag = 'internal scratch']
  #allocation2 [shape = 'f32[1,1]{1,0:T(1,128)S(6)}', space=smem, size = 0x200, scoped, tag = 'scoped memory for tpu_custom_call.1']
  %s0 = inlined_call_operand.vmem [shape: f32[8,128], index: 0, kind: input, shape index: {}]
  %s1 = inlined_call_operand.vmem [shape: bf16[128,8], index: 1, kind: input, shape index: {}]
  %s2 = inlined_call_operand.vmem [shape: f32[128,1], index: 2, kind: input, shape index: {}]
  %s3 = inlined_call_operand.vmem [shape: bf16[64,128], index: 3, kind: input, shape index: {}]
  %s4 = inlined_call_operand.vmem [shape: f32[64,1], index: 4, kind: input, shape index: {}]
  %s5 = inlined_call_operand.vmem [shape: f32[64,1], index: 5, kind: input, shape index: {}]
  %s6 = inlined_call_operand.<no memory space> [shape: f32[1,1], index: 6, kind: input, shape index: {}]
  %s7 = inlined_call_operand.hbm [shape: f32[1,128], index: 7, kind: output, shape index: {}]
  %s8 = sld [smem:[#allocation0]]
  $region38: #{tpu_custom_call.1} parent=0
    _
  %s10 = ssub.s32 1, %s8
  %s11 = scalar_select 0, %s10, %s8
  %12 = sst [smem:[#allocation2]] %s6
  $region1: #{tpu_custom_call.1} parent=0
    #allocation3 [shape = 'u8[512]{0}', space=vmem, size = 0x400, scoped, tag = 'output window, operand 0, single buffered']
    #allocation4 [shape = 's32[1]{0}', space=sflag, size = 0x4, scoped, tag = 'scoped memory for tpu_custom_call.1']
    %13 = vsyncpa [#allocation4], 0
    // Predicated region
    $region2: #{tpu_custom_call.1} parent=1 // pred_check
      _
    $region3: #{tpu_custom_call.1} parent=1 // pred_check_branch
      %15 = sbr.rel (0) target = $region5
    $region4: #{tpu_custom_call.1} parent=1 // pred_region
      _
    $region5: #{tpu_custom_call.1} parent=1 // pred_fallthru
      _
    // Predicated region
    $region6: #{tpu_custom_call.1} parent=1 // pred_check
      _
    $region7: #{tpu_custom_call.1} parent=1 // pred_check_branch
      %17 = sbr.rel (0) target = $region9
    $region8: #{tpu_custom_call.1} parent=1 // pred_region
      _
    $region9: #{tpu_custom_call.1} parent=1 // pred_fallthru
      _
    // Predicated region
    $region10: #{tpu_custom_call.1} parent=1 // pred_check
      _
    $region11: #{tpu_custom_call.1} parent=1 // pred_check_branch
      %19 = sbr.rel (0) target = $region13
    $region12: #{tpu_custom_call.1} parent=1 // pred_region
      _
    $region13: #{tpu_custom_call.1} parent=1 // pred_fallthru
      _
    // Predicated region
    $region14: #{tpu_custom_call.1} parent=1 // pred_check
      _
    $region15: #{tpu_custom_call.1} parent=1 // pred_check_branch
      %21 = sbr.rel (0) target = $region17
    $region16: #{tpu_custom_call.1} parent=1 // pred_region
      _
    $region17: #{tpu_custom_call.1} parent=1 // pred_fallthru
      _
    // Predicated region
    $region18: #{tpu_custom_call.1} parent=1 // pred_check
      _
    $region19: #{tpu_custom_call.1} parent=1 // pred_check_branch
      %23 = sbr.rel (0) target = $region21
    $region20: #{tpu_custom_call.1} parent=1 // pred_region
      _
    $region21: #{tpu_custom_call.1} parent=1 // pred_fallthru
      _
    // Predicated region
    $region22: #{tpu_custom_call.1} parent=1 // pred_check
      _
    $region23: #{tpu_custom_call.1} parent=1 // pred_check_branch
      %25 = sbr.rel (0) target = $region25
    $region24: #{tpu_custom_call.1} parent=1 // pred_region
      _
    $region25: #{tpu_custom_call.1} parent=1 // pred_fallthru
      _
    // Predicated region
    $region26: #{tpu_custom_call.1} parent=1 // pred_check
      _
    $region27: #{tpu_custom_call.1} parent=1 // pred_check_branch
      %27 = sbr.rel (0) target = $region29
    $region28: #{tpu_custom_call.1} parent=1 // pred_region
      _
    $region29: #{tpu_custom_call.1} parent=1 // pred_fallthru
      _
    %v29 = vld [vmem:[%s0] sm:$0xff]
    %v30 = vpack.c.bf16 %v29, %v29
    %v31 = vld [vmem:[%s1] sm:$0xf]
    %v32 = vld [vmem:[%s1 + $0x4] sm:$0xf]
    %v33 = vld [vmem:[%s1 + $0x8] sm:$0xf]
    %v34 = vld [vmem:[%s1 + $0xc] sm:$0xf]
    %v35 = vld [vmem:[%s1 + $0x10] sm:$0xf]
    %v36 = vld [vmem:[%s1 + $0x14] sm:$0xf]
    %v37 = vld [vmem:[%s1 + $0x18] sm:$0xf]
    %v38 = vld [vmem:[%s1 + $0x1c] sm:$0xf]
    %v39 = vld [vmem:[%s1 + $0x20] sm:$0xf]
    %v40 = vld [vmem:[%s1 + $0x24] sm:$0xf]
    %v41 = vld [vmem:[%s1 + $0x28] sm:$0xf]
    %v42 = vld [vmem:[%s1 + $0x2c] sm:$0xf]
    %v43 = vld [vmem:[%s1 + $0x30] sm:$0xf]
    %v44 = vld [vmem:[%s1 + $0x34] sm:$0xf]
    %v45 = vld [vmem:[%s1 + $0x38] sm:$0xf]
    %v46 = vld [vmem:[%s1 + $0x3c] sm:$0xf]
    %v47 = vld [vmem:[%s2] sm:$0xff]
    %v48 = vld [vmem:[%s2 + $0x8] sm:$0xff]
    %v49 = vld [vmem:[%s2 + $0x10] sm:$0xff]
    %v50 = vld [vmem:[%s2 + $0x18] sm:$0xff]
    %v51 = vld [vmem:[%s2 + $0x20] sm:$0xff]
    %v52 = vld [vmem:[%s2 + $0x28] sm:$0xff]
    %v53 = vld [vmem:[%s2 + $0x30] sm:$0xff]
    %v54 = vld [vmem:[%s2 + $0x38] sm:$0xff]
    %v55 = vld [vmem:[%s2 + $0x40] sm:$0xff]
    %v56 = vld [vmem:[%s2 + $0x48] sm:$0xff]
    %v57 = vld [vmem:[%s2 + $0x50] sm:$0xff]
    %v58 = vld [vmem:[%s2 + $0x58] sm:$0xff]
    %v59 = vld [vmem:[%s2 + $0x60] sm:$0xff]
    %v60 = vld [vmem:[%s2 + $0x68] sm:$0xff]
    %v61 = vld [vmem:[%s2 + $0x70] sm:$0xff]
    %v62 = vld [vmem:[%s2 + $0x78] sm:$0xff]
    %64 = vset.pattern.permute.xlu0 0
    %65 = vperm.xlu0 %64, %v47
    %v66 = vpop.permute.xlu0 %65
    %69 = vset.pattern.permute.xlu0 0
    %70 = vperm.xlu0 %69, %v48
    %v71 = vpop.permute.xlu0 %70
    %74 = vset.pattern.permute.xlu0 0
    %75 = vperm.xlu0 %74, %v49
    %v76 = vpop.permute.xlu0 %75
    %79 = vset.pattern.permute.xlu0 0
    %80 = vperm.xlu0 %79, %v50
    %v81 = vpop.permute.xlu0 %80
    %84 = vset.pattern.permute.xlu0 0
    %85 = vperm.xlu0 %84, %v51
    %v86 = vpop.permute.xlu0 %85
    %89 = vset.pattern.permute.xlu0 0
    %90 = vperm.xlu0 %89, %v52
    %v91 = vpop.permute.xlu0 %90
    %94 = vset.pattern.permute.xlu0 0
    %95 = vperm.xlu0 %94, %v53
    %v96 = vpop.permute.xlu0 %95
    %99 = vset.pattern.permute.xlu0 0
    %100 = vperm.xlu0 %99, %v54
    %v101 = vpop.permute.xlu0 %100
    %104 = vset.pattern.permute.xlu0 0
    %105 = vperm.xlu0 %104, %v55
    %v106 = vpop.permute.xlu0 %105
    %109 = vset.pattern.permute.xlu0 0
    %110 = vperm.xlu0 %109, %v56
    %v111 = vpop.permute.xlu0 %110
    %114 = vset.pattern.permute.xlu0 0
    %115 = vperm.xlu0 %114, %v57
    %v116 = vpop.permute.xlu0 %115
    %119 = vset.pattern.permute.xlu0 0
    %120 = vperm.xlu0 %119, %v58
    %v121 = vpop.permute.xlu0 %120
    %124 = vset.pattern.permute.xlu0 0
    %125 = vperm.xlu0 %124, %v59
    %v126 = vpop.permute.xlu0 %125
    %129 = vset.pattern.permute.xlu0 0
    %130 = vperm.xlu0 %129, %v60
    %v131 = vpop.permute.xlu0 %130
    %134 = vset.pattern.permute.xlu0 0
    %135 = vperm.xlu0 %134, %v61
    %v136 = vpop.permute.xlu0 %135
    %139 = vset.pattern.permute.xlu0 0
    %140 = vperm.xlu0 %139, %v62
    %v141 = vpop.permute.xlu0 %140
    %v159 = vunpack.c.l.b16 %v31
    %v160 = vunpack.c.l.b16 %v32
    %v161 = vunpack.c.l.b16 %v33
    %v162 = vunpack.c.l.b16 %v34
    %v163 = vunpack.c.l.b16 %v35
    %v164 = vunpack.c.l.b16 %v36
    %v165 = vunpack.c.l.b16 %v37
    %v166 = vunpack.c.l.b16 %v38
    %v167 = vunpack.c.l.b16 %v39
    %v168 = vunpack.c.l.b16 %v40
    %v169 = vunpack.c.l.b16 %v41
    %v170 = vunpack.c.l.b16 %v42
    %v171 = vunpack.c.l.b16 %v43
    %v172 = vunpack.c.l.b16 %v44
    %v173 = vunpack.c.l.b16 %v45
    %v174 = vunpack.c.l.b16 %v46
    %v175 = vpack.c.b16 %v160, %v159
    %v176 = vpack.c.b16 %v162, %v161
    %v177 = vpack.c.b16 %v164, %v163
    %v178 = vpack.c.b16 %v166, %v165
    %v179 = vpack.c.b16 %v168, %v167
    %v180 = vpack.c.b16 %v170, %v169
    %v181 = vpack.c.b16 %v172, %v171
    %v182 = vpack.c.b16 %v174, %v173
    %vm183 = vcmask 64512
    %v185 = vsel %vm183, %v175, 0
    %v188 = vsel %vm183, %v176, 0
    %v191 = vsel %vm183, %v177, 0
    %v194 = vsel %vm183, %v178, 0
    %v197 = vsel %vm183, %v179, 0
    %v200 = vsel %vm183, %v180, 0
    %v203 = vsel %vm183, %v181, 0
    %v206 = vsel %vm183, %v182, 0
    %vm208 = vcmask 1043456
    %v210 = vsel %vm208, %v30, 0
    %212 = vmatprep.subr.bf16.mxu0 0
    %213 = vmatpush1.bf16.msra.mxu0 0
    %214 = vmatprep.subr.bf16.mxu0 0
    %215 = vmatpush1.bf16.msra.mxu0 0
    %216 = vmatprep.subr.bf16.mxu0 0
    %217 = vmatpush1.bf16.msra.mxu0 0
    %218 = vmatprep.subr.bf16.mxu0 0
    %219 = vmatpush1.bf16.msra.mxu0 0
    %220 = vmatprep.subr.bf16.mxu0 0
    %221 = vmatpush1.bf16.msra.mxu0 0
    %222 = vmatprep.subr.bf16.mxu0 0
    %223 = vmatpush1.bf16.msra.mxu0 0
    %224 = vmatprep.subr.bf16.mxu0 0
    %225 = vmatpush1.bf16.msra.mxu0 0
    %226 = vmatprep.subr.bf16.mxu0 0
    %227 = vmatpush1.bf16.msra.mxu0 %v210
    %228 = vmatprep.subr.bf16.mxu0 0
    %229 = vmatpush2.bf16.msra.mxu0 0
    %230 = vmatprep.subr.bf16.mxu0 0
    %231 = vmatpush2.bf16.msra.mxu0 0
    %232 = vmatprep.subr.bf16.mxu0 0
    %233 = vmatpush2.bf16.msra.mxu0 0
    %234 = vmatprep.subr.bf16.mxu0 0
    %235 = vmatpush2.bf16.msra.mxu0 0
    %236 = vmatprep.subr.bf16.mxu0 0
    %237 = vmatpush2.bf16.msra.mxu0 0
    %238 = vmatprep.subr.bf16.mxu0 0
    %239 = vmatpush2.bf16.msra.mxu0 0
    %240 = vmatprep.subr.bf16.mxu0 0
    %241 = vmatpush2.bf16.msra.mxu0 0
    %242 = vmatprep.subr.bf16.mxu0 0
    %243 = vmatpush2.bf16.msra.mxu0 0
    %244 = vmatprep.mubr.bf16.mxu0 0
    %245 = vmatmul.mubr.bf16.gmra.mxu0 %v185
    %v246 = vpop.f32.mrf.mxu0
    %v247 = vadd.f32 %v66, %v246
    %v248 = vpop.f32.mrf.mxu0
    %v249 = vpop.f32.mrf.mxu0
    %v250 = vadd.f32 %v71, %v249
    %v251 = vpop.f32.mrf.mxu0
    %252 = vmatprep.mubr.bf16.mxu0 0
    %253 = vmatmul.mubr.bf16.gmra.mxu0 %v188
    %v254 = vpop.f32.mrf.mxu0
    %v255 = vadd.f32 %v76, %v254
    %v256 = vpop.f32.mrf.mxu0
    %v257 = vpop.f32.mrf.mxu0
    %v258 = vadd.f32 %v81, %v257
    %v259 = vpop.f32.mrf.mxu0
    %260 = vmatprep.mubr.bf16.mxu0 0
    %261 = vmatmul.mubr.bf16.gmra.mxu0 %v191
    %v262 = vpop.f32.mrf.mxu0
    %v263 = vadd.f32 %v86, %v262
    %v264 = vpop.f32.mrf.mxu0
    %v265 = vpop.f32.mrf.mxu0
    %v266 = vadd.f32 %v91, %v265
    %v267 = vpop.f32.mrf.mxu0
    %268 = vmatprep.mubr.bf16.mxu0 0
    %269 = vmatmul.mubr.bf16.gmra.mxu0 %v194
    %v270 = vpop.f32.mrf.mxu0
    %v271 = vadd.f32 %v96, %v270
    %v272 = vpop.f32.mrf.mxu0
    %v273 = vpop.f32.mrf.mxu0
    %v274 = vadd.f32 %v101, %v273
    %v275 = vpop.f32.mrf.mxu0
    %276 = vmatprep.mubr.bf16.mxu0 0
    %277 = vmatmul.mubr.bf16.gmra.mxu0 %v197
    %v278 = vpop.f32.mrf.mxu0
    %v279 = vadd.f32 %v106, %v278
    %v280 = vpop.f32.mrf.mxu0
    %v281 = vpop.f32.mrf.mxu0
    %v282 = vadd.f32 %v111, %v281
    %v283 = vpop.f32.mrf.mxu0
    %284 = vmatprep.mubr.bf16.mxu0 0
    %285 = vmatmul.mubr.bf16.gmra.mxu0 %v200
    %v286 = vpop.f32.mrf.mxu0
    %v287 = vadd.f32 %v116, %v286
    %v288 = vpop.f32.mrf.mxu0
    %v289 = vpop.f32.mrf.mxu0
    %v290 = vadd.f32 %v121, %v289
    %v291 = vpop.f32.mrf.mxu0
    %292 = vmatprep.mubr.bf16.mxu0 0
    %293 = vmatmul.mubr.bf16.gmra.mxu0 %v203
    %v294 = vpop.f32.mrf.mxu0
    %v295 = vadd.f32 %v126, %v294
    %v296 = vpop.f32.mrf.mxu0
    %v297 = vpop.f32.mrf.mxu0
    %v298 = vadd.f32 %v131, %v297
    %v299 = vpop.f32.mrf.mxu0
    %300 = vmatprep.mubr.bf16.mxu0 0
    %301 = vmatmul.mubr.bf16.gmra.mxu0 %v206
    %v302 = vpop.f32.mrf.mxu0
    %v303 = vadd.f32 %v136, %v302
    %v304 = vpop.f32.mrf.mxu0
    %v305 = vpop.f32.mrf.mxu0
    %v306 = vadd.f32 %v141, %v305
    %v307 = vpop.f32.mrf.mxu0
    %308 = vdwg.mxu0
    %v309 = vmax.f32 %v247, 0.0
    %v310 = vmax.f32 %v250, 0.0
    %v311 = vmax.f32 %v255, 0.0
    %v312 = vmax.f32 %v258, 0.0
    %v313 = vmax.f32 %v263, 0.0
    %v314 = vmax.f32 %v266, 0.0
    %v315 = vmax.f32 %v271, 0.0
    %v316 = vmax.f32 %v274, 0.0
    %v317 = vmax.f32 %v279, 0.0
    %v318 = vmax.f32 %v282, 0.0
    %v319 = vmax.f32 %v287, 0.0
    %v320 = vmax.f32 %v290, 0.0
    %v321 = vmax.f32 %v295, 0.0
    %v322 = vmax.f32 %v298, 0.0
    %v323 = vmax.f32 %v303, 0.0
    %v324 = vmax.f32 %v306, 0.0
    %v325 = vld [vmem:[%s3] sm:$0xf]
    %v326 = vld [vmem:[%s3 + $0x4] sm:$0xf]
    %v327 = vld [vmem:[%s3 + $0x8] sm:$0xf]
    %v328 = vld [vmem:[%s3 + $0xc] sm:$0xf]
    %v329 = vld [vmem:[%s3 + $0x10] sm:$0xf]
    %v330 = vld [vmem:[%s3 + $0x14] sm:$0xf]
    %v331 = vld [vmem:[%s3 + $0x18] sm:$0xf]
    %v332 = vld [vmem:[%s3 + $0x1c] sm:$0xf]
    %v333 = vpack.c.bf16 %v310, %v309
    %v334 = vpack.c.bf16 %v312, %v311
    %v335 = vpack.c.bf16 %v314, %v313
    %v336 = vpack.c.bf16 %v316, %v315
    %v337 = vpack.c.bf16 %v318, %v317
    %v338 = vpack.c.bf16 %v320, %v319
    %v339 = vpack.c.bf16 %v322, %v321
    %v340 = vpack.c.bf16 %v324, %v323
    %v341 = vld [vmem:[%s4] sm:$0xff]
    %v342 = vld [vmem:[%s4 + $0x8] sm:$0xff]
    %v343 = vld [vmem:[%s4 + $0x10] sm:$0xff]
    %v344 = vld [vmem:[%s4 + $0x18] sm:$0xff]
    %v345 = vld [vmem:[%s4 + $0x20] sm:$0xff]
    %v346 = vld [vmem:[%s4 + $0x28] sm:$0xff]
    %v347 = vld [vmem:[%s4 + $0x30] sm:$0xff]
    %v348 = vld [vmem:[%s4 + $0x38] sm:$0xff]
    %350 = vset.pattern.permute.xlu0 0
    %351 = vperm.xlu0 %350, %v341
    %v352 = vpop.permute.xlu0 %351
    %355 = vset.pattern.permute.xlu0 0
    %356 = vperm.xlu0 %355, %v342
    %v357 = vpop.permute.xlu0 %356
    %360 = vset.pattern.permute.xlu0 0
    %361 = vperm.xlu0 %360, %v343
    %v362 = vpop.permute.xlu0 %361
    %365 = vset.pattern.permute.xlu0 0
    %366 = vperm.xlu0 %365, %v344
    %v367 = vpop.permute.xlu0 %366
    %370 = vset.pattern.permute.xlu0 0
    %371 = vperm.xlu0 %370, %v345
    %v372 = vpop.permute.xlu0 %371
    %375 = vset.pattern.permute.xlu0 0
    %376 = vperm.xlu0 %375, %v346
    %v377 = vpop.permute.xlu0 %376
    %380 = vset.pattern.permute.xlu0 0
    %381 = vperm.xlu0 %380, %v347
    %v382 = vpop.permute.xlu0 %381
    %385 = vset.pattern.permute.xlu0 0
    %386 = vperm.xlu0 %385, %v348
    %v387 = vpop.permute.xlu0 %386
    %v397 = vunpack.c.l.b16 %v325
    %v398 = vunpack.c.l.b16 %v326
    %v399 = vunpack.c.l.b16 %v327
    %v400 = vunpack.c.l.b16 %v328
    %v401 = vunpack.c.l.b16 %v329
    %v402 = vunpack.c.l.b16 %v330
    %v403 = vunpack.c.l.b16 %v331
    %v404 = vunpack.c.l.b16 %v332
    %v405 = vpack.c.b16 %v398, %v397
    %v406 = vpack.c.b16 %v400, %v399
    %v407 = vpack.c.b16 %v402, %v401
    %v408 = vpack.c.b16 %v404, %v403
    %413 = vmatprep.subr.bf16.mxu0 0
    %414 = vmatpush1.bf16.msra.mxu0 %v340
    %415 = vmatprep.subr.bf16.mxu0 0
    %416 = vmatpush1.bf16.msra.mxu0 %v339
    %417 = vmatprep.subr.bf16.mxu0 0
    %418 = vmatpush1.bf16.msra.mxu0 %v338
    %419 = vmatprep.subr.bf16.mxu0 0
    %420 = vmatpush1.bf16.msra.mxu0 %v337
    %421 = vmatprep.subr.bf16.mxu0 0
    %422 = vmatpush1.bf16.msra.mxu0 %v336
    %423 = vmatprep.subr.bf16.mxu0 0
    %424 = vmatpush1.bf16.msra.mxu0 %v335
    %425 = vmatprep.subr.bf16.mxu0 0
    %426 = vmatpush1.bf16.msra.mxu0 %v334
    %427 = vmatprep.subr.bf16.mxu0 0
    %428 = vmatpush1.bf16.msra.mxu0 %v333
    %429 = vmatprep.subr.bf16.mxu0 0
    %430 = vmatpush2.bf16.msra.mxu0 0
    %431 = vmatprep.subr.bf16.mxu0 0
    %432 = vmatpush2.bf16.msra.mxu0 0
    %433 = vmatprep.subr.bf16.mxu0 0
    %434 = vmatpush2.bf16.msra.mxu0 0
    %435 = vmatprep.subr.bf16.mxu0 0
    %436 = vmatpush2.bf16.msra.mxu0 0
    %437 = vmatprep.subr.bf16.mxu0 0
    %438 = vmatpush2.bf16.msra.mxu0 0
    %439 = vmatprep.subr.bf16.mxu0 0
    %440 = vmatpush2.bf16.msra.mxu0 0
    %441 = vmatprep.subr.bf16.mxu0 0
    %442 = vmatpush2.bf16.msra.mxu0 0
    %443 = vmatprep.subr.bf16.mxu0 0
    %444 = vmatpush2.bf16.msra.mxu0 0
    %445 = vmatprep.mubr.bf16.mxu0 0
    %446 = vmatmul.mubr.bf16.gmra.mxu0 %v405
    %v447 = vpop.f32.mrf.mxu0
    %v448 = vadd.f32 %v352, %v447
    %v449 = vpop.f32.mrf.mxu0
    %v450 = vpop.f32.mrf.mxu0
    %v451 = vadd.f32 %v357, %v450
    %v452 = vpop.f32.mrf.mxu0
    %453 = vmatprep.mubr.bf16.mxu0 0
    %454 = vmatmul.mubr.bf16.gmra.mxu0 %v406
    %v455 = vpop.f32.mrf.mxu0
    %v456 = vadd.f32 %v362, %v455
    %v457 = vpop.f32.mrf.mxu0
    %v458 = vpop.f32.mrf.mxu0
    %v459 = vadd.f32 %v367, %v458
    %v460 = vpop.f32.mrf.mxu0
    %461 = vmatprep.mubr.bf16.mxu0 0
    %462 = vmatmul.mubr.bf16.gmra.mxu0 %v407
    %v463 = vpop.f32.mrf.mxu0
    %v464 = vadd.f32 %v372, %v463
    %v465 = vpop.f32.mrf.mxu0
    %v466 = vpop.f32.mrf.mxu0
    %v467 = vadd.f32 %v377, %v466
    %v468 = vpop.f32.mrf.mxu0
    %469 = vmatprep.mubr.bf16.mxu0 0
    %470 = vmatmul.mubr.bf16.gmra.mxu0 %v408
    %v471 = vpop.f32.mrf.mxu0
    %v472 = vadd.f32 %v382, %v471
    %v473 = vpop.f32.mrf.mxu0
    %v474 = vpop.f32.mrf.mxu0
    %v475 = vadd.f32 %v387, %v474
    %v476 = vpop.f32.mrf.mxu0
    %477 = vdwg.mxu0
    %v478 = vmax.f32 %v448, 0.0
    %v479 = vmax.f32 %v451, 0.0
    %v480 = vmax.f32 %v456, 0.0
    %v481 = vmax.f32 %v459, 0.0
    %v482 = vmax.f32 %v464, 0.0
    %v483 = vmax.f32 %v467, 0.0
    %v484 = vmax.f32 %v472, 0.0
    %v485 = vmax.f32 %v475, 0.0
    %v486 = vld [vmem:[%s5] sm:$0xff]
    %v487 = vld [vmem:[%s5 + $0x8] sm:$0xff]
    %v488 = vld [vmem:[%s5 + $0x10] sm:$0xff]
    %v489 = vld [vmem:[%s5 + $0x18] sm:$0xff]
    %v490 = vld [vmem:[%s5 + $0x20] sm:$0xff]
    %v491 = vld [vmem:[%s5 + $0x28] sm:$0xff]
    %v492 = vld [vmem:[%s5 + $0x30] sm:$0xff]
    %v493 = vld [vmem:[%s5 + $0x38] sm:$0xff]
    %495 = vset.pattern.permute.xlu0 0
    %496 = vperm.xlu0 %495, %v486
    %v497 = vpop.permute.xlu0 %496
    %500 = vset.pattern.permute.xlu0 0
    %501 = vperm.xlu0 %500, %v487
    %v502 = vpop.permute.xlu0 %501
    %505 = vset.pattern.permute.xlu0 0
    %506 = vperm.xlu0 %505, %v488
    %v507 = vpop.permute.xlu0 %506
    %510 = vset.pattern.permute.xlu0 0
    %511 = vperm.xlu0 %510, %v489
    %v512 = vpop.permute.xlu0 %511
    %515 = vset.pattern.permute.xlu0 0
    %516 = vperm.xlu0 %515, %v490
    %v517 = vpop.permute.xlu0 %516
    %520 = vset.pattern.permute.xlu0 0
    %521 = vperm.xlu0 %520, %v491
    %v522 = vpop.permute.xlu0 %521
    %525 = vset.pattern.permute.xlu0 0
    %526 = vperm.xlu0 %525, %v492
    %v527 = vpop.permute.xlu0 %526
    %530 = vset.pattern.permute.xlu0 0
    %531 = vperm.xlu0 %530, %v493
    %v532 = vpop.permute.xlu0 %531
    %v534 = vmul.f32 %v478, %v497
    %v535 = vmul.f32 %v479, %v502
    %v536 = vmul.f32 %v480, %v507
    %v537 = vmul.f32 %v481, %v512
    %v538 = vmul.f32 %v482, %v517
    %v539 = vmul.f32 %v483, %v522
    %v540 = vmul.f32 %v484, %v527
    %v541 = vmul.f32 %v485, %v532
    %v542 = vadd.f32 %v534, %v535
    %v543 = vadd.f32 %v542, %v536
    %v544 = vadd.f32 %v543, %v537
    %v545 = vadd.f32 %v544, %v538
    %v546 = vadd.f32 %v545, %v539
    %v547 = vadd.f32 %v546, %v540
    %v548 = vadd.f32 %v547, %v541
    %v549 = vrot.slane %v548, 4
    %v550 = vadd.f32 %v548, %v549
    %v551 = vrot.slane %v550, 2
    %v552 = vadd.f32 %v550, %v551
    %v553 = vrot.slane %v552, 1
    %v554 = vadd.f32 %v552, %v553
    %s555 = sld [smem:[#allocation2]]
    %v556 = vstv %s555
    %v557 = vadd.f32 %v554, %v556
    %v558 = vsub.f32 0.0, %v557
    %v559 = vmul.f32 %v558, 1.442695
    %v560 = vpow.pop %v559
    %v561 = vadd.f32 %v560, 1.0
    %v562 = vrcp.pop %v561
    %563 = vst [vmem:[#allocation3] sm:$0x1] %v562
    // Predicated region
    $region30: #{tpu_custom_call.1} parent=1 // pred_check
      _
    $region31: #{tpu_custom_call.1} parent=1 // pred_check_branch
      %565 = sbr.rel (0) target = $region33
    $region32: #{tpu_custom_call.1} parent=1 // pred_region
      %s567 = ssub.s32 16, 16
      %568 = vsyncadd [#allocation4], %s567
      %s570 = sshll.u32 [#allocation3], 4
      %s571 = int_to_ptr.vmem [resolvable:$true] %s570
      %573 = dma.vmem_to_hbm [thread:$0]  %s571, 16, %s7, [#allocation4]
    $region33: #{tpu_custom_call.1} parent=1 // pred_fallthru
      _
    // Predicated region
    $region34: #{tpu_custom_call.1} parent=1 // pred_check
      _
    $region35: #{tpu_custom_call.1} parent=1 // pred_check_branch
      %575 = sbr.rel (0) target = $region37
    $region36: #{tpu_custom_call.1} parent=1 // pred_region
      %576 = dma.done [#allocation4], 16
    $region37: #{tpu_custom_call.1} parent=1 // pred_fallthru
      _
    %577 = vsyncpa [#allocation4], 1

</llo_original>
